<compile_context>
chip_gen: v7x
topology: tpu7x:2x2x1
jax: 0.10.0
libtpu: 0.0.40
codegen_flags: <defaults>
</compile_context>

<pallas_src>
import functools

import jax
import jax.numpy as jnp
from jax import lax
from jax.experimental import pallas as pl
from jax.experimental.pallas import tpu as pltpu


_LANES = 512                 # lane-dense width (multiple of 128)
_MAX_REDUCE_CHUNKS = 8       # outer "parallel" axis for the reduction


def _cdiv(a, b):
    return -(-a // b)


def _round_up(a, b):
    return _cdiv(a, b) * b


@functools.lru_cache(maxsize=None)
def _tiling_config():
    """Return (max_tile_rows, vmem_limit_bytes), TPU-generation aware."""
    vmem_bytes = 64 * 1024 * 1024
    try:
        info = pltpu.get_tpu_info()
        vmem_bytes = int(getattr(info, "vmem_capacity_bytes", vmem_bytes))
    except Exception:
        pass  # conservative default (treat as v7x-sized VMEM)
    if vmem_bytes >= 128 * 1024 * 1024:      # v5e / v6e: 128 MiB VMEM
        return 2048, 64 * 1024 * 1024        # 4 MiB f32 per input stream
    return 1024, 40 * 1024 * 1024            # v7x: 64 MiB per-TC VMEM


# ----------------------------------------------------------------------------
# Kernels
# ----------------------------------------------------------------------------
def _mse_none_kernel(pred_ref, targ_ref, out_ref, *, loss_weight):
    """Element-wise loss_weight * (pred - target)^2 for one lane-dense tile."""
    d = pred_ref[...].astype(jnp.float32) - targ_ref[...].astype(jnp.float32)
    r = d * d
    if loss_weight != 1.0:
        r = r * jnp.float32(loss_weight)
    out_ref[...] = r.astype(out_ref.dtype)


def _mse_none_weighted_kernel(pred_ref, targ_ref, w_ref, out_ref, *, loss_weight):
    d = pred_ref[...].astype(jnp.float32) - targ_ref[...].astype(jnp.float32)
    r = w_ref[...].astype(jnp.float32) * (d * d)
    if loss_weight != 1.0:
        r = r * jnp.float32(loss_weight)
    out_ref[...] = r.astype(out_ref.dtype)


def _accumulate_partial(d2, part_ref, *, rows_valid, tile_m, steps, needs_mask):
    """Mask out-of-range rows (tail/clamped tiles) and fold into (8, LANES)."""
    if needs_mask:
        t = pl.program_id(0) * steps + pl.program_id(1)
        row = t * tile_m + lax.broadcasted_iota(jnp.int32, d2.shape, 0)
        d2 = jnp.where(row < rows_valid, d2, 0.0)
    # Sublane fold with VPU adds; the tiny final cross-lane reduce happens
    # outside the kernel on the (n_chunks*8, LANES) partials.
    part_ref[...] += jnp.sum(d2.reshape(-1, 8, d2.shape[-1]), axis=0)


def _mse_partial_sum_kernel(pred_ref, targ_ref, part_ref, *,
                            rows_valid, tile_m, steps, needs_mask):
    @pl.when(pl.program_id(1) == 0)
    def _():
        part_ref[...] = jnp.zeros_like(part_ref)

    d = pred_ref[...].astype(jnp.float32) - targ_ref[...].astype(jnp.float32)
    _accumulate_partial(d * d, part_ref, rows_valid=rows_valid,
                        tile_m=tile_m, steps=steps, needs_mask=needs_mask)


def _mse_partial_sum_weighted_kernel(pred_ref, targ_ref, w_ref, part_ref, *,
                                     rows_valid, tile_m, steps, needs_mask):
    @pl.when(pl.program_id(1) == 0)
    def _():
        part_ref[...] = jnp.zeros_like(part_ref)

    d = pred_ref[...].astype(jnp.float32) - targ_ref[...].astype(jnp.float32)
    d2 = w_ref[...].astype(jnp.float32) * (d * d)
    _accumulate_partial(d2, part_ref, rows_valid=rows_valid,
                        tile_m=tile_m, steps=steps, needs_mask=needs_mask)


# ----------------------------------------------------------------------------
# Wrapper
# ----------------------------------------------------------------------------
def _lane_view(x, rows):
    """Flatten to 1-D and view as (rows, _LANES).

    Only pads (full-array copy) when numel is not a multiple of 512; all other
    non-divisibility (tiles / chunks) is handled in-kernel via partial blocks
    and masking, so the common case is copy-free."""
    flat = x.reshape(-1)
    pad = rows * _LANES - flat.shape[0]
    if pad:
        flat = jnp.pad(flat, (0, pad))
    return flat.reshape(rows, _LANES)


class MSELossPallas:
    """Pallas port of the PyTorch MSELoss module.

    loss = loss_weight * reduce( [weight *] (pred - target)^2 )
      reduction='none' -> element-wise tensor (same shape as pred)
      reduction='mean' -> scalar, sum / numel
      reduction='sum'  -> scalar, sum
    """

    _reduction_modes = ["none", "mean", "sum"]

    def __init__(self, loss_weight=1.0, reduction="mean"):
        if reduction not in self._reduction_modes:
            raise ValueError(
                f"Unsupported reduction mode: {reduction}. "
                f"Supported ones are: {self._reduction_modes}"
            )
        self.loss_weight = float(loss_weight)
        self.reduction = reduction

    def __call__(self, pred, target, weight=None):
        assert pred.shape == target.shape
        if weight is not None:
            assert weight.shape == pred.shape

        shape = pred.shape
        numel = int(pred.size)
        rows = _cdiv(numel, _LANES)
        max_tile_rows, vmem_limit = _tiling_config()
        tile_m = min(max_tile_rows, _round_up(rows, 32))  # multiple of 32

        pred2 = _lane_view(pred, rows)
        targ2 = _lane_view(target, rows)
        w2 = _lane_view(weight, rows) if weight is not None else None

        if self.reduction == "none":
            n_tiles = _cdiv(rows, tile_m)
            spec = pl.BlockSpec((tile_m, _LANES), lambda i: (i, 0))
            if weight is None:
                kernel = functools.partial(
                    _mse_none_kernel, loss_weight=self.loss_weight)
                operands = (pred2, targ2)
                in_specs = [spec, spec]
            else:
                kernel = functools.partial(
                    _mse_none_weighted_kernel, loss_weight=self.loss_weight)
                operands = (pred2, targ2, w2)
                in_specs = [spec, spec, spec]

            out = pl.pallas_call(
                kernel,
                out_shape=jax.ShapeDtypeStruct((rows, _LANES), pred.dtype),
                grid_spec=pltpu.PrefetchScalarGridSpec(
                    num_scalar_prefetch=0,
                    grid=(n_tiles,),
                    in_specs=in_specs,
                    out_specs=spec,
                ),
                compiler_params=pltpu.CompilerParams(
                    dimension_semantics=("parallel",),
                    vmem_limit_bytes=vmem_limit,
                ),
            )(*operands)

            out_flat = out.reshape(-1)
            if rows * _LANES != numel:           # skip slice when no pad
                out_flat = out_flat[:numel]
            return out_flat.reshape(shape)

        # ---- 'mean' / 'sum': two-level reduction --------------------------
        total_tiles = _cdiv(rows, tile_m)
        n_chunks = min(_MAX_REDUCE_CHUNKS, total_tiles)
        steps = _cdiv(total_tiles, n_chunks)
        needs_mask = (rows % tile_m != 0) or (n_chunks * steps != total_tiles)

        def in_map(c, j):
            t = c * steps + j
            # Clamp fully-out-of-range tiles to the last tile (contribution is
            # masked to zero in-kernel); repeated block index => DMA skipped.
            return (jnp.minimum(t, total_tiles - 1), 0)

        in_spec = pl.BlockSpec((tile_m, _LANES), in_map)
        out_spec = pl.BlockSpec((8, _LANES), lambda c, j: (c, 0))

        kw = dict(rows_valid=rows, tile_m=tile_m, steps=steps,
                  needs_mask=needs_mask)
        if weight is None:
            kernel = functools.partial(_mse_partial_sum_kernel, **kw)
            operands = (pred2, targ2)
            in_specs = [in_spec, in_spec]
        else:
            kernel = functools.partial(_mse_partial_sum_weighted_kernel, **kw)
            operands = (pred2, targ2, w2)
            in_specs = [in_spec, in_spec, in_spec]

        partials = pl.pallas_call(
            kernel,
            out_shape=jax.ShapeDtypeStruct((n_chunks * 8, _LANES), jnp.float32),
            grid_spec=pltpu.PrefetchScalarGridSpec(
                num_scalar_prefetch=0,
                grid=(n_chunks, steps),
                in_specs=in_specs,
                out_specs=out_spec,
            ),
            compiler_params=pltpu.CompilerParams(
                dimension_semantics=("parallel", "arbitrary"),
                vmem_limit_bytes=vmem_limit,
            ),
        )(*operands)

        total = jnp.sum(partials)  # tiny (<=128 KiB) final cross-lane reduce
        if self.reduction == "mean":
            total = total / jnp.float32(numel)
        return (jnp.float32(self.loss_weight) * total).astype(pred.dtype)


# ----------------------------------------------------------------------------
# Self-test
# ----------------------------------------------------------------------------
def _reference(pred, target, weight, loss_weight, reduction):
    d = (pred.astype(jnp.float32) - target.astype(jnp.float32)) ** 2
    if weight is not None:
        d = d * weight.astype(jnp.float32)
    if reduction == "none":
        return loss_weight * d
    if reduction == "sum":
        return loss_weight * jnp.sum(d)
    return loss_weight * jnp.mean(d)


if __name__ == "__main__":
    key = jax.random.PRNGKey(0)
    k1, k2, k3 = jax.random.split(key, 3)
    shape = (2, 4, 16, 16)  # (N, C, H, W)
    pred = jax.random.normal(k1, shape, dtype=jnp.float32)
    target = jax.random.normal(k2, shape, dtype=jnp.float32)
    weight = jax.random.uniform(k3, shape, dtype=jnp.float32)
    # TODO(synk): the given PyTorch code passes `weight` positionally into
    # F.mse_loss (where it lands on the deprecated `size_average` slot); here
    # we implement the intended element-wise-weighted MSE semantics instead.

    ok = True
    for reduction in ("mean", "sum", "none"):
        loss_fn = MSELossPallas(loss_weight=1.0, reduction=reduction)
        out = jax.block_until_ready(loss_fn(pred, target))
        ref = _reference(pred, target, None, 1.0, reduction)
        ok &= bool(jnp.allclose(out, ref, rtol=1e-5, atol=1e-5))

    # weighted path, non-default loss_weight
    loss_fn = MSELossPallas(loss_weight=0.5, reduction="mean")
    out = jax.block_until_ready(loss_fn(pred, target, weight))
    ref = _reference(pred, target, weight, 0.5, "mean")
    ok &= bool(jnp.allclose(out, ref, rtol=1e-5, atol=1e-5))

    # awkward numel (exercises the 512-pad reshape, partial tiles and masking)
    shape2 = (3, 5, 24, 40)
    p2 = jax.random.normal(k1, shape2, dtype=jnp.float32)
    t2 = jax.random.normal(k2, shape2, dtype=jnp.float32)
    for reduction in ("mean", "none"):
        loss_fn = MSELossPallas(loss_weight=1.0, reduction=reduction)
        out = jax.block_until_ready(loss_fn(p2, t2))
        ref = _reference(p2, t2, None, 1.0, reduction)
        ok &= bool(jnp.allclose(out, ref, rtol=1e-5, atol=1e-5))

    if not ok:
        raise SystemExit("mismatch vs reference")
    print("KERNEL_OK")
</pallas_src>

<mosaic_0001>
module attributes {stable_mosaic.version = 11 : i64} {
  func.func @_mse_partial_sum_kernel(%arg0: i32, %arg1: i32, %arg2: memref<32x512xf32, #tpu.memory_space<vmem>>, %arg3: memref<32x512xf32, #tpu.memory_space<vmem>>, %arg4: memref<8x512xf32, #tpu.memory_space<vmem>>) attributes {dimension_semantics = [#tpu.dimension_semantics<parallel>, #tpu.dimension_semantics<arbitrary>], iteration_bounds = array<i64: 1, 1>, scalar_prefetch = 0 : i64, scratch_operands = 0 : i64, tpu.core_type = #tpu.core_type<tc>, window_params = [{transform_indices = @transform_0, window_bounds = array<i64: 32, 512>}, {transform_indices = @transform_1, window_bounds = array<i64: 32, 512>}, {transform_indices = @transform_2, window_bounds = array<i64: 8, 512>}]} {
    %c0_i32 = arith.constant 0 : i32
    %0 = arith.cmpi eq, %arg1, %c0_i32 : i32
    %1 = arith.extui %0 : i1 to i32
    %c0_i32_0 = arith.constant 0 : i32
    %2 = arith.cmpi ne, %1, %c0_i32_0 : i32
    scf.if %2 {
      %cst_9 = arith.constant 0.000000e+00 : f32
      %22 = vector.broadcast %cst_9 : f32 to vector<8x512xf32>
      %c0_10 = arith.constant 0 : index
      %c0_11 = arith.constant 0 : index
      %23 = vector.load %arg4[%c0_10, %c0_11] : memref<8x512xf32, #tpu.memory_space<vmem>>, vector<8x512xf32>
      tpu.vector_store %arg4[%c0_10, %c0_11], %22 {strides = array<i32>} : memref<8x512xf32, #tpu.memory_space<vmem>>, vector<8x512xf32>,
    } else {
    }
    %c0 = arith.constant 0 : index
    %c0_1 = arith.constant 0 : index
    %3 = vector.load %arg2[%c0, %c0_1] : memref<32x512xf32, #tpu.memory_space<vmem>>, vector<32x512xf32>
    %c0_2 = arith.constant 0 : index
    %c0_3 = arith.constant 0 : index
    %4 = vector.load %arg3[%c0_2, %c0_3] : memref<32x512xf32, #tpu.memory_space<vmem>>, vector<32x512xf32>
    %5 = arith.subf %3, %4 : vector<32x512xf32>
    %6 = arith.mulf %5, %5 : vector<32x512xf32>
    %c1_i32 = arith.constant 1 : i32
    %7 = arith.muli %arg0, %c1_i32 : i32
    %8 = arith.addi %7, %arg1 : i32
    %c32_i32 = arith.constant 32 : i32
    %9 = arith.muli %8, %c32_i32 : i32
    %10 = tpu.iota {dimensions = array<i32: 0>} : vector<32x512xi32>
    %11 = vector.broadcast %9 : i32 to vector<32x512xi32>
    %12 = arith.addi %11, %10 : vector<32x512xi32>
    %c4_i32 = arith.constant 4 : i32
    %13 = vector.broadcast %c4_i32 : i32 to vector<32x512xi32>
    %14 = arith.cmpi slt, %12, %13 : vector<32x512xi32>
    %cst = arith.constant 0.000000e+00 : f32
    %15 = vector.broadcast %cst : f32 to vector<32x512xf32>
    %16 = arith.select %14, %6, %15 : vector<32x512xi1>, vector<32x512xf32>
    %c0_4 = arith.constant 0 : index
    %c0_5 = arith.constant 0 : index
    %17 = vector.load %arg4[%c0_4, %c0_5] : memref<8x512xf32, #tpu.memory_space<vmem>>, vector<8x512xf32>
    %18 = vector.shape_cast %16 : vector<32x512xf32> to vector<4x8x512xf32>
    %cst_6 = arith.constant dense<0.000000e+00> : vector<8x512xf32>
    %19 = vector.multi_reduction <add>, %18, %cst_6 [0] : vector<4x8x512xf32> to vector<8x512xf32>
    %20 = arith.addf %17, %19 : vector<8x512xf32>
    %c0_7 = arith.constant 0 : index
    %c0_8 = arith.constant 0 : index
    %21 = vector.load %arg4[%c0_7, %c0_8] : memref<8x512xf32, #tpu.memory_space<vmem>>, vector<8x512xf32>
    tpu.vector_store %arg4[%c0_7, %c0_8], %20 {strides = array<i32>} : memref<8x512xf32, #tpu.memory_space<vmem>>, vector<8x512xf32>,
    return
  }
  func.func @transform_0(%arg0: i32, %arg1: i32) -> (i32, i32) {
    %c1_i32 = arith.constant 1 : i32
    %0 = arith.muli %arg0, %c1_i32 : i32
    %1 = arith.addi %0, %arg1 : i32
    %c0_i32 = arith.constant 0 : i32
    %2 = arith.minsi %1, %c0_i32 : i32
    %c0_i32_0 = arith.constant 0 : i32
    %c0_i32_1 = arith.constant 0 : i32
    return %2, %c0_i32_0 : i32, i32
  }
  func.func @transform_1(%arg0: i32, %arg1: i32) -> (i32, i32) {
    %c1_i32 = arith.constant 1 : i32
    %0 = arith.muli %arg0, %c1_i32 : i32
    %1 = arith.addi %0, %arg1 : i32
    %c0_i32 = arith.constant 0 : i32
    %2 = arith.minsi %1, %c0_i32 : i32
    %c0_i32_0 = arith.constant 0 : i32
    %c0_i32_1 = arith.constant 0 : i32
    return %2, %c0_i32_0 : i32, i32
  }
  func.func @transform_2(%arg0: i32, %arg1: i32) -> (i32, i32) {
    %c0_i32 = arith.constant 0 : i32
    %c0_i32_0 = arith.constant 0 : i32
    return %arg0, %c0_i32 : i32, i32
  }
}

</mosaic_0001>

<llo_original>
// kernel: tpu_custom_call.1
$region0: #{tpu_custom_call.1}
  #allocation0 [shape = 'u32[]', space=smem, size = 0x4, offset = 0x4, fixed_abs, tag = 'smem constant byte address 0x4 - core index']
  #allocation1 [shape = 'u32[144,128]{1,0:T(1,128)}', space=vmem, size = 0x12000, scoped, tag = 'internal scratch']
  %s0 = inlined_call_operand.hbm [shape: f32[4,512], index: 0, kind: input, shape index: {}]
  %s1 = inlined_call_operand.hbm [shape: f32[4,512], index: 1, kind: input, shape index: {}]
  %s2 = inlined_call_operand.hbm [shape: f32[8,512], index: 2, kind: output, shape index: {}]
  %s3 = sld [smem:[#allocation0]]
  $region30: #{tpu_custom_call.1} parent=0
    _
  %s5 = ssub.s32 1, %s3
  %s6 = scalar_select 0, %s5, %s3
  $region1: #{tpu_custom_call.1} parent=0
    #allocation2 [shape = 'u8[65536]{0}', space=vmem, size = 0x10000, scoped, tag = 'input window, operand 0, single buffered']
    #allocation3 [shape = 's32[1]{0}', space=sflag, size = 0x4, scoped, tag = 'scoped memory for tpu_custom_call.1']
    #allocation4 [shape = 's32[1]{0}', space=sflag, size = 0x4, scoped, tag = 'scoped memory for tpu_custom_call.1']
    #allocation5 [shape = 'u8[65536]{0}', space=vmem, size = 0x10000, scoped, tag = 'input window, operand 1, single buffered']
    #allocation6 [shape = 's32[1]{0}', space=sflag, size = 0x4, scoped, tag = 'scoped memory for tpu_custom_call.1']
    #allocation7 [shape = 'u8[16384]{0}', space=vmem, size = 0x4000, scoped, tag = 'output window, operand 0, single buffered']
    %7 = vsyncpa [#allocation3], 0
    %8 = vsyncpa [#allocation6], 0
    %9 = vsyncpa [#allocation4], 0
    // Predicated region
    $region2: #{tpu_custom_call.1} parent=1 // pred_check
      _
    $region3: #{tpu_custom_call.1} parent=1 // pred_check_branch
      %11 = sbr.rel (0) target = $region5
    $region4: #{tpu_custom_call.1} parent=1 // pred_region
      %s12 = sadd.s32 0, 0
      %p13 = scmp.lt.s32.totalorder %s12, 0
      %s14 = scalar_select %p13, %s12, 0
      %s15 = smul.u32 8, %s14
      %s16 = ssub.s32 1, %s15
      %s17 = smul.u32 64, %s16
      %s18 = smul.u32 %s17, 4
      %s20 = ssub.s32 2048, %s18
      %21 = vsyncadd [#allocation3], %s20
      %p22 = scmp.ne.s32.totalorder 0, %s18
      %s23 = smul.addr %s15, 4
      %s24 = smul.addr %s23, 64
      %s25 = scalar_lea.hbm %s0, %s24
      %s26 = smul.u32 16, %s16
      %s27 = sshll.u32 [#allocation2], 4
      %s28 = int_to_ptr.vmem [resolvable:$true] %s27
      %s29 = sshll.u32 %s26, 4
      %33 = dma.hbm_to_vmem [thread:$0]  (%p22), %s25, %s29, %s28, [#allocation3], 256, 256, 16
    $region5: #{tpu_custom_call.1} parent=1 // pred_fallthru
      _
    // Predicated region
    $region6: #{tpu_custom_call.1} parent=1 // pred_check
      _
    $region7: #{tpu_custom_call.1} parent=1 // pred_check_branch
      %35 = sbr.rel (0) target = $region9
    $region8: #{tpu_custom_call.1} parent=1 // pred_region
      %s36 = sadd.s32 0, 0
      %p37 = scmp.lt.s32.totalorder %s36, 0
      %s38 = scalar_select %p37, %s36, 0
      %s39 = smul.u32 8, %s38
      %s40 = ssub.s32 1, %s39
      %s41 = smul.u32 64, %s40
      %s42 = smul.u32 %s41, 4
      %s44 = ssub.s32 2048, %s42
      %45 = vsyncadd [#allocation6], %s44
      %p46 = scmp.ne.s32.totalorder 0, %s42
      %s47 = smul.addr %s39, 4
      %s48 = smul.addr %s47, 64
      %s49 = scalar_lea.hbm %s1, %s48
      %s50 = smul.u32 16, %s40
      %s51 = sshll.u32 [#allocation5], 4
      %s52 = int_to_ptr.vmem [resolvable:$true] %s51
      %s53 = sshll.u32 %s50, 4
      %57 = dma.hbm_to_vmem [thread:$0]  (%p46), %s49, %s53, %s52, [#allocation6], 256, 256, 16
    $region9: #{tpu_custom_call.1} parent=1 // pred_fallthru
      _
    // Predicated region
    $region10: #{tpu_custom_call.1} parent=1 // pred_check
      _
    $region11: #{tpu_custom_call.1} parent=1 // pred_check_branch
      %59 = sbr.rel (0) target = $region13
    $region12: #{tpu_custom_call.1} parent=1 // pred_region
      %60 = dma.done [#allocation3], 2048
    $region13: #{tpu_custom_call.1} parent=1 // pred_fallthru
      _
    // Predicated region
    $region14: #{tpu_custom_call.1} parent=1 // pred_check
      _
    $region15: #{tpu_custom_call.1} parent=1 // pred_check_branch
      %62 = sbr.rel (0) target = $region17
    $region16: #{tpu_custom_call.1} parent=1 // pred_region
      %63 = dma.done [#allocation6], 2048
    $region17: #{tpu_custom_call.1} parent=1 // pred_fallthru
      _
    %s64 = sadd.s32 0, 0
    %p65 = scmp.lt.s32.totalorder %s64, 0
    %s66 = scalar_select %p65, %s64, 0
    %s67 = smul.u32 8, %s66
    %s68 = ssub.s32 1, %s67
    %s69 = smul.u32 64, %s68
    %s70 = smul.u32 %s69, 4
    %s71 = sadd.s32 0, 0
    %p72 = scmp.lt.s32.totalorder %s71, 0
    %s73 = scalar_select %p72, %s71, 0
    %s74 = smul.u32 8, %s73
    %s75 = ssub.s32 1, %s74
    %s76 = smul.u32 64, %s75
    %s77 = smul.u32 %s76, 4
    %p78 = scmp.eq.s32.totalorder 0, 0
    // Predicated region
    $region18: #{tpu_custom_call.1} parent=1 // pred_check
      %p79 = pneg %p78
    $region19: #{tpu_custom_call.1} parent=1 // pred_check_branch
      %81 = sbr.rel (%p79) target = $region21
    $region20: #{tpu_custom_call.1} parent=1 // pred_region
      %82 = vst [vmem:[#allocation7] sm:$0xff] 0.0
      %83 = vst [vmem:[#allocation7 + $0x8] sm:$0xff] 0.0
      %84 = vst [vmem:[#allocation7 + $0x10] sm:$0xff] 0.0
      %85 = vst [vmem:[#allocation7 + $0x18] sm:$0xff] 0.0
    $region21: #{tpu_custom_call.1} parent=1 // pred_fallthru
      _
    %v86 = vld [vmem:[#allocation2] sm:$0xff]
    %v87 = vld [vmem:[#allocation2 + $0x8] sm:$0xff]
    %v88 = vld [vmem:[#allocation2 + $0x10] sm:$0xff]
    %v89 = vld [vmem:[#allocation2 + $0x18] sm:$0xff]
    %v90 = vld [vmem:[#allocation2 + $0x20] sm:$0xff]
    %v91 = vld [vmem:[#allocation2 + $0x28] sm:$0xff]
    %v92 = vld [vmem:[#allocation2 + $0x30] sm:$0xff]
    %v93 = vld [vmem:[#allocation2 + $0x38] sm:$0xff]
    %v94 = vld [vmem:[#allocation2 + $0x40] sm:$0xff]
    %v95 = vld [vmem:[#allocation2 + $0x48] sm:$0xff]
    %v96 = vld [vmem:[#allocation2 + $0x50] sm:$0xff]
    %v97 = vld [vmem:[#allocation2 + $0x58] sm:$0xff]
    %v98 = vld [vmem:[#allocation2 + $0x60] sm:$0xff]
    %v99 = vld [vmem:[#allocation2 + $0x68] sm:$0xff]
    %v100 = vld [vmem:[#allocation2 + $0x70] sm:$0xff]
    %v101 = vld [vmem:[#allocation2 + $0x78] sm:$0xff]
    %v102 = vld [vmem:[#allocation5] sm:$0xff]
    %v103 = vld [vmem:[#allocation5 + $0x8] sm:$0xff]
    %v104 = vld [vmem:[#allocation5 + $0x10] sm:$0xff]
    %v105 = vld [vmem:[#allocation5 + $0x18] sm:$0xff]
    %v106 = vld [vmem:[#allocation5 + $0x20] sm:$0xff]
    %v107 = vld [vmem:[#allocation5 + $0x28] sm:$0xff]
    %v108 = vld [vmem:[#allocation5 + $0x30] sm:$0xff]
    %v109 = vld [vmem:[#allocation5 + $0x38] sm:$0xff]
    %v110 = vld [vmem:[#allocation5 + $0x40] sm:$0xff]
    %v111 = vld [vmem:[#allocation5 + $0x48] sm:$0xff]
    %v112 = vld [vmem:[#allocation5 + $0x50] sm:$0xff]
    %v113 = vld [vmem:[#allocation5 + $0x58] sm:$0xff]
    %v114 = vld [vmem:[#allocation5 + $0x60] sm:$0xff]
    %v115 = vld [vmem:[#allocation5 + $0x68] sm:$0xff]
    %v116 = vld [vmem:[#allocation5 + $0x70] sm:$0xff]
    %v117 = vld [vmem:[#allocation5 + $0x78] sm:$0xff]
    %v118 = vsub.f32 %v86, %v102
    %v119 = vsub.f32 %v87, %v103
    %v120 = vsub.f32 %v88, %v104
    %v121 = vsub.f32 %v89, %v105
    %v122 = vsub.f32 %v90, %v106
    %v123 = vsub.f32 %v91, %v107
    %v124 = vsub.f32 %v92, %v108
    %v125 = vsub.f32 %v93, %v109
    %v126 = vsub.f32 %v94, %v110
    %v127 = vsub.f32 %v95, %v111
    %v128 = vsub.f32 %v96, %v112
    %v129 = vsub.f32 %v97, %v113
    %v130 = vsub.f32 %v98, %v114
    %v131 = vsub.f32 %v99, %v115
    %v132 = vsub.f32 %v100, %v116
    %v133 = vsub.f32 %v101, %v117
    %v134 = vmul.f32 %v118, %v118
    %v135 = vmul.f32 %v119, %v119
    %v136 = vmul.f32 %v120, %v120
    %v137 = vmul.f32 %v121, %v121
    %v138 = vmul.f32 %v122, %v122
    %v139 = vmul.f32 %v123, %v123
    %v140 = vmul.f32 %v124, %v124
    %v141 = vmul.f32 %v125, %v125
    %v142 = vmul.f32 %v126, %v126
    %v143 = vmul.f32 %v127, %v127
    %v144 = vmul.f32 %v128, %v128
    %v145 = vmul.f32 %v129, %v129
    %v146 = vmul.f32 %v130, %v130
    %v147 = vmul.f32 %v131, %v131
    %v148 = vmul.f32 %v132, %v132
    %v149 = vmul.f32 %v133, %v133
    %s150 = sadd.s32 0, 0
    %s151 = smul.u32 %s150, 32
    %v152 = vlaneseq
    %v153 = vshrl.u32 %v152, 7
    %v154 = vadd.s32 %v153, 8
    %v155 = vadd.s32 %v153, 16
    %v156 = vadd.s32 %v153, 24
    %v157 = vstv %s151
    %v158 = vadd.s32 %v157, %v153
    %v159 = vadd.s32 %v157, %v154
    %v160 = vadd.s32 %v157, %v155
    %v161 = vadd.s32 %v157, %v156
    %vm162 = vcmp.lt.s32.totalorder %v158, 4
    %vm163 = vcmp.lt.s32.totalorder %v159, 4
    %vm164 = vcmp.lt.s32.totalorder %v160, 4
    %vm165 = vcmp.lt.s32.totalorder %v161, 4
    %v182 = vcombine.low %v134, %v136
    %v183 = vcombine.high %v134, %v136
    %v184 = vcombine.low %v135, %v137
    %v185 = vcombine.high %v135, %v137
    %v186 = vcombine.low %v138, %v140
    %v187 = vcombine.high %v138, %v140
    %v188 = vcombine.low %v139, %v141
    %v189 = vcombine.high %v139, %v141
    %v190 = vcombine.low %v142, %v144
    %v191 = vcombine.high %v142, %v144
    %v192 = vcombine.low %v143, %v145
    %v193 = vcombine.high %v143, %v145
    %v194 = vcombine.low %v146, %v148
    %v195 = vcombine.high %v146, %v148
    %v196 = vcombine.low %v147, %v149
    %v197 = vcombine.high %v147, %v149
    %v214 = vsel %vm162, %v182, 0.0
    %v215 = vsel %vm162, %v183, 0.0
    %v216 = vsel %vm162, %v184, 0.0
    %v217 = vsel %vm162, %v185, 0.0
    %v218 = vsel %vm163, %v186, 0.0
    %v219 = vsel %vm163, %v187, 0.0
    %v220 = vsel %vm163, %v188, 0.0
    %v221 = vsel %vm163, %v189, 0.0
    %v222 = vsel %vm164, %v190, 0.0
    %v223 = vsel %vm164, %v191, 0.0
    %v224 = vsel %vm164, %v192, 0.0
    %v225 = vsel %vm164, %v193, 0.0
    %v226 = vsel %vm165, %v194, 0.0
    %v227 = vsel %vm165, %v195, 0.0
    %v228 = vsel %vm165, %v196, 0.0
    %v229 = vsel %vm165, %v197, 0.0
    %v230 = vld [vmem:[#allocation7] sm:$0xff]
    %v231 = vld [vmem:[#allocation7 + $0x8] sm:$0xff]
    %v232 = vld [vmem:[#allocation7 + $0x10] sm:$0xff]
    %v233 = vld [vmem:[#allocation7 + $0x18] sm:$0xff]
    %v234 = vadd.f32 %v214, %v218
    %v235 = vadd.f32 %v234, %v222
    %v236 = vadd.f32 %v235, %v226
    %v237 = vadd.f32 %v215, %v219
    %v238 = vadd.f32 %v237, %v223
    %v239 = vadd.f32 %v238, %v227
    %v240 = vadd.f32 %v216, %v220
    %v241 = vadd.f32 %v240, %v224
    %v242 = vadd.f32 %v241, %v228
    %v243 = vadd.f32 %v217, %v221
    %v244 = vadd.f32 %v243, %v225
    %v245 = vadd.f32 %v244, %v229
    %v246 = vadd.f32 %v230, %v236
    %v247 = vadd.f32 %v231, %v239
    %v248 = vadd.f32 %v232, %v242
    %v249 = vadd.f32 %v233, %v245
    %250 = vst [vmem:[#allocation7] sm:$0xff] %v246
    %251 = vst [vmem:[#allocation7 + $0x8] sm:$0xff] %v247
    %252 = vst [vmem:[#allocation7 + $0x10] sm:$0xff] %v248
    %253 = vst [vmem:[#allocation7 + $0x18] sm:$0xff] %v249
    // Predicated region
    $region22: #{tpu_custom_call.1} parent=1 // pred_check
      _
    $region23: #{tpu_custom_call.1} parent=1 // pred_check_branch
      %255 = sbr.rel (0) target = $region25
    $region24: #{tpu_custom_call.1} parent=1 // pred_region
      %s257 = ssub.s32 512, 512
      %258 = vsyncadd [#allocation4], %s257
      %s260 = sshll.u32 [#allocation7], 4
      %s261 = int_to_ptr.vmem [resolvable:$true] %s260
      %263 = dma.vmem_to_hbm [thread:$0]  %s261, 512, %s2, [#allocation4]
    $region25: #{tpu_custom_call.1} parent=1 // pred_fallthru
      _
    // Predicated region
    $region26: #{tpu_custom_call.1} parent=1 // pred_check
      _
    $region27: #{tpu_custom_call.1} parent=1 // pred_check_branch
      %265 = sbr.rel (0) target = $region29
    $region28: #{tpu_custom_call.1} parent=1 // pred_region
      %266 = dma.done [#allocation4], 512
    $region29: #{tpu_custom_call.1} parent=1 // pred_fallthru
      _
    %267 = vsyncpa [#allocation3], 1
    %268 = vsyncpa [#allocation6], 1
    %269 = vsyncpa [#allocation4], 1

</llo_original>
